<compile_context>
chip_gen: v7x
topology: tpu7x:2x2x1
jax: 0.10.0
libtpu: 0.0.40
codegen_flags: <defaults>
</compile_context>

<pallas_src>
import jax
import jax.numpy as jnp
from jax.experimental import pallas as pl
from jax.experimental.pallas import tpu as pltpu


def _fused_linear_kernel(x_ref, w_ref, b_ref, o_ref):
    """x_ref: (T, N*D)   w_ref: (N*D, D*O)   b_ref: (1, D*O)   o_ref: (T, D*O)."""
    y = jnp.dot(x_ref[...], w_ref[...], preferred_element_type=jnp.float32)
    o_ref[...] = (y + b_ref[...]).astype(o_ref.dtype)


def _round_up(v, m):
    return -(-v // m) * m


def _pick_row_tile(num_rows, k_dim, o_dim, itemsize,
                   vmem_budget=24 * 1024 * 1024):
    """Largest valid divisor of num_rows whose (8,128)-padded, double-buffered
    in/out tiles (plus resident weight+bias buffers) fit the VMEM budget.
    Prefers a single grid step: per-step compute here is tiny compared to the
    ~0.35 us fixed step overhead, so more steps (or cross-TC sharding) never
    pays at these sizes."""
    k_pad = _round_up(k_dim, 128)
    o_pad = _round_up(o_dim, 128)
    # Weight + bias buffers (conservatively counted as double-buffered).
    fixed = 2 * (_round_up(k_dim, 8) * o_pad + 8 * o_pad) * itemsize

    def fits(t):
        t_pad = _round_up(t, 8)
        per_step = 2 * t_pad * (k_pad + o_pad) * itemsize  # dbl-buffered in+out
        return fixed + per_step <= vmem_budget

    candidates = [d for d in range(1, num_rows + 1)
                  if num_rows % d == 0
                  and (d == num_rows or d % 8 == 0)   # (8,128) block rule
                  and fits(d)]
    return max(candidates) if candidates else num_rows


def debug_model_forward(x, w, b):
    """x: (B, L, N, D); fc weight (N, O), bias (O,). Returns (B, L, D*O//3, 3)."""
    B, L, N, D = x.shape
    O = w.shape[1]
    assert w.shape[0] == N, "fc in_dim must equal N"
    assert (D * O) % 3 == 0, "D * out_dim must be divisible by 3 for final reshape"

    BL = B * L
    K = N * D          # contraction width (lane-dense: 512 = 4 x 128)
    OD = D * O         # output width    (lane-dense: 384 = 3 x 128)
    itemsize = jnp.dtype(x.dtype).itemsize

    # Row-major leading-dim reshape: no data movement, no permute in HBM.
    x2 = x.reshape(BL, K)

    # Block-diagonal weight: W2[n*D + d, e*O + o] = w[n, o] * (d == e).
    eye_d = jnp.eye(D, dtype=w.dtype)
    w2 = jnp.einsum("no,de->ndeo", w, eye_d).reshape(K, OD)
    # Bias tiled over d: bias2[d*O + o] = b[o].
    bias2 = jnp.tile(b, D).reshape(1, OD)

    tbl = _pick_row_tile(BL, K, OD, itemsize)
    grid = (BL // tbl,)

    cost = pl.CostEstimate(
        flops=2 * BL * K * OD,
        transcendentals=0,
        bytes_accessed=(x.size + w2.size + bias2.size + BL * OD) * itemsize,
    )

    y = pl.pallas_call(
        _fused_linear_kernel,
        out_shape=jax.ShapeDtypeStruct((BL, OD), x.dtype),
        grid_spec=pltpu.PrefetchScalarGridSpec(
            num_scalar_prefetch=0,
            grid=grid,
            in_specs=[
                pl.BlockSpec((tbl, K), lambda i: (i, 0)),   # x rows, lane-dense
                pl.BlockSpec((K, OD), lambda i: (0, 0)),    # block-diag weight
                pl.BlockSpec((1, OD), lambda i: (0, 0)),    # tiled bias
            ],
            out_specs=pl.BlockSpec((tbl, OD), lambda i: (i, 0)),
        ),
        compiler_params=pltpu.CompilerParams(
            dimension_semantics=("parallel",),
            vmem_limit_bytes=32 * 1024 * 1024,
        ),
        cost_estimate=cost,
    )(x2, w2, bias2)

    # Row-major (BL, D*O) -> (B, L, D*O//3, 3) is a pure bitcast.
    return y.reshape(B, L, -1, 3)


if __name__ == "__main__":
    # Shapes consistent with the forward pass:
    #   x: (B=2, L=8, N=32, D=16)  -> fc in_dim = N = 32
    #   out_dim = 24 -> D*out_dim = 384, reshaped to (B, L, 128, 3)
    B, L, N, D = 2, 8, 32, 16
    in_dim, out_dim = N, 24

    key = jax.random.PRNGKey(0)
    kx, kw, kb = jax.random.split(key, 3)

    x = jax.random.normal(kx, (B, L, N, D), dtype=jnp.float32)

    # Deterministic PyTorch-style Linear init: U(-1/sqrt(in_dim), 1/sqrt(in_dim))
    bound = 1.0 / (in_dim ** 0.5)
    w = jax.random.uniform(kw, (in_dim, out_dim), jnp.float32, -bound, bound)
    b = jax.random.uniform(kb, (out_dim,), jnp.float32, -bound, bound)

    out = jax.jit(debug_model_forward)(x, w, b)
    out = jax.block_until_ready(out)

    # Reference check in plain JAX (mirrors the PyTorch module exactly)
    x2d_ref = jnp.transpose(x, (0, 1, 3, 2)).reshape(B * L * D, N)
    ref = (x2d_ref @ w + b).reshape(B, L, -1, 3)
    assert out.shape == (B, L, D * out_dim // 3, 3), out.shape
    assert jnp.allclose(out, ref, atol=1e-5, rtol=1e-5)

    print("KERNEL_OK")
</pallas_src>

<mosaic_0001>
module attributes {stable_mosaic.version = 11 : i64} {
  func.func @_fused_linear_kernel(%arg0: i32, %arg1: memref<16x512xf32, #tpu.memory_space<vmem>>, %arg2: memref<512x384xf32, #tpu.memory_space<vmem>>, %arg3: memref<1x384xf32, #tpu.memory_space<vmem>>, %arg4: memref<16x384xf32, #tpu.memory_space<vmem>>) attributes {dimension_semantics = [#tpu.dimension_semantics<parallel>], iteration_bounds = array<i64: 1>, scalar_prefetch = 0 : i64, scratch_operands = 0 : i64, tpu.core_type = #tpu.core_type<tc>, window_params = [{transform_indices = @transform_0, window_bounds = array<i64: 16, 512>}, {pipeline_mode = #tpu.pipeline_mode<synchronous>, transform_indices = @transform_1, window_bounds = array<i64: 512, 384>}, {pipeline_mode = #tpu.pipeline_mode<synchronous>, transform_indices = @transform_2, window_bounds = array<i64: 1, 384>}, {transform_indices = @transform_3, window_bounds = array<i64: 16, 384>}]} {
    %c0 = arith.constant 0 : index
    %c0_0 = arith.constant 0 : index
    %0 = vector.load %arg1[%c0, %c0_0] : memref<16x512xf32, #tpu.memory_space<vmem>>, vector<16x512xf32>
    %c0_1 = arith.constant 0 : index
    %c0_2 = arith.constant 0 : index
    %1 = vector.load %arg2[%c0_1, %c0_2] : memref<512x384xf32, #tpu.memory_space<vmem>>, vector<512x384xf32>
    %cst = arith.constant dense<0.000000e+00> : vector<16x384xf32>
    %2 = tpu.matmul %0, %1, %cst {dimension_numbers = #tpu.dot_dimension_numbers<[1], [0], [0], [1], [0, 0, 1, 1], [], []>} : vector<16x512xf32>, vector<512x384xf32>, vector<16x384xf32> -> vector<16x384xf32>
    %c0_3 = arith.constant 0 : index
    %c0_4 = arith.constant 0 : index
    %3 = vector.load %arg3[%c0_3, %c0_4] : memref<1x384xf32, #tpu.memory_space<vmem>>, vector<1x384xf32>
    %4 = vector.broadcast %3 : vector<1x384xf32> to vector<16x384xf32>
    %5 = arith.addf %2, %4 : vector<16x384xf32>
    %c0_5 = arith.constant 0 : index
    %c0_6 = arith.constant 0 : index
    %6 = vector.load %arg4[%c0_5, %c0_6] : memref<16x384xf32, #tpu.memory_space<vmem>>, vector<16x384xf32>
    tpu.vector_store %arg4[%c0_5, %c0_6], %5 {strides = array<i32>} : memref<16x384xf32, #tpu.memory_space<vmem>>, vector<16x384xf32>,
    return
  }
  func.func @transform_0(%arg0: i32) -> (i32, i32) {
    %c0_i32 = arith.constant 0 : i32
    %c0_i32_0 = arith.constant 0 : i32
    return %arg0, %c0_i32 : i32, i32
  }
  func.func @transform_1(%arg0: i32) -> (i32, i32) {
    %c0_i32 = arith.constant 0 : i32
    %c0_i32_0 = arith.constant 0 : i32
    %c0_i32_1 = arith.constant 0 : i32
    return %c0_i32, %c0_i32_0 : i32, i32
  }
  func.func @transform_2(%arg0: i32) -> (i32, i32) {
    %c0_i32 = arith.constant 0 : i32
    %c0_i32_0 = arith.constant 0 : i32
    %c0_i32_1 = arith.constant 0 : i32
    return %c0_i32, %c0_i32_0 : i32, i32
  }
  func.func @transform_3(%arg0: i32) -> (i32, i32) {
    %c0_i32 = arith.constant 0 : i32
    %c0_i32_0 = arith.constant 0 : i32
    return %arg0, %c0_i32 : i32, i32
  }
}

</mosaic_0001>

<llo_original>
// kernel: tile.8
$region0: #{tile.8}
  #allocation0 [shape = 's32[1]{0}', space=sflag, size = 0x4, scoped, tag = 'scoped memory for tile.8']
  %s0 = inlined_call_operand.vmem [shape: f32[24], index: 0, kind: input, shape index: {}]
  %s1 = inlined_call_operand.vmem [shape: f32[16,24], index: 1, kind: output, shape index: {}]
  // Predicated region
  $region2: #{tile.8} parent=0 // pred_check
    _
  $region3: #{tile.8} parent=0 // pred_check_branch
    %3 = sbr.rel (0) target = $region5
  $region4: #{tile.8} parent=0 // pred_region
    _
  $region5: #{tile.8} parent=0 // pred_fallthru
    _
  %v4 = vld [vmem:[%s0] ss:$0 sm:$0xff]
  %5 = vst [vmem:[%s1] sm:$0xff] %v4
  %s6 = scalar_lea.vmem %s1, 8
  %7 = vst [vmem:[%s6] sm:$0xff] %v4

// kernel: tile.9
$region0: #{tile.9}
  %s0 = inlined_call_operand.vmem [shape: f32[16,24], index: 0, kind: input, shape index: {}]
  %s1 = inlined_call_operand.vmem [shape: f32[1,384], index: 1, kind: output, shape index: {}]
  $region1: #{tile.9} parent=0
    #allocation0 [shape = 'u8[12288]{0}', space=vmem, size = 0x3000, scoped, tag = 'scoped mem for output reshape']
    %v2 = vld [vmem:[%s0] sm:$0x1]
    %vm3 = vcmask 195584
    %4 = vst.msk [vmem:[#allocation0] sm:$0x1] %vm3, %v2
    %s5 = scalar_lea.vmem %s0, 5
    %v6 = vld [vmem:[%s5] sm:$0x1]
    %s7 = scalar_lea.vmem %s0, 5
    %v8 = vld [vmem:[%s7] sm:$0x1]
    %vm9 = vcmask 64512
    %v10 = vsel %vm9, %v8, %v6
    %11 = vrot.lane.b32.xlu0 %v10, 120
    %v12 = vpop.permute.xlu0 %11
    %vm13 = vcmask 130048
    %s14 = scalar_lea.vmem [#allocation0], 8
    %15 = vst.msk [vmem:[%s14] sm:$0x1] %vm13, %v12
    %vm16 = vcmask 1048512
    %17 = vst.msk [vmem:[#allocation0] sm:$0x1] %vm16, %v12
    %s18 = scalar_lea.vmem %s0, 10
    %v19 = vld [vmem:[%s18] sm:$0x1]
    %s20 = scalar_lea.vmem %s0, 10
    %v21 = vld [vmem:[%s20] sm:$0x1]
    %vm22 = vcmask 130048
    %v23 = vsel %vm22, %v21, %v19
    %24 = vrot.lane.b32.xlu0 %v23, 112
    %v25 = vpop.permute.xlu0 %24
    %vm26 = vcmask 64512
    %s27 = scalar_lea.vmem [#allocation0], 16
    %28 = vst.msk [vmem:[%s27] sm:$0x1] %vm26, %v25
    %vm29 = vcmask 1048448
    %s30 = scalar_lea.vmem [#allocation0], 8
    %31 = vst.msk [vmem:[%s30] sm:$0x1] %vm29, %v25
    %s32 = scalar_lea.vmem %s0, 15
    %v33 = vld [vmem:[%s32] sm:$0x1]
    %34 = vrot.lane.b32.xlu0 %v33, 104
    %v35 = vpop.permute.xlu0 %34
    %vm36 = vcmask 1048384
    %s37 = scalar_lea.vmem [#allocation0], 16
    %38 = vst.msk [vmem:[%s37] sm:$0x1] %vm36, %v35
    %s39 = scalar_lea.vmem %s0, 4
    %v40 = vld [vmem:[%s39] sm:$0x1]
    %41 = vrot.lane.b32.xlu0 %v40, 96
    %v42 = vpop.permute.xlu0 %41
    %vm43 = vcmask 982784
    %44 = vst.msk [vmem:[#allocation0] sm:$0x1] %vm43, %v42
    %s45 = scalar_lea.vmem %s0, 9
    %v46 = vld [vmem:[%s45] sm:$0x1]
    %47 = vrot.lane.b32.xlu0 %v46, 88
    %v48 = vpop.permute.xlu0 %47
    %vm49 = vcmask 917184
    %s50 = scalar_lea.vmem [#allocation0], 8
    %51 = vst.msk [vmem:[%s50] sm:$0x1] %vm49, %v48
    %s52 = scalar_lea.vmem %s0, 14
    %v53 = vld [vmem:[%s52] sm:$0x1]
    %54 = vrot.lane.b32.xlu0 %v53, 80
    %v55 = vpop.permute.xlu0 %54
    %vm56 = vcmask 851584
    %s57 = scalar_lea.vmem [#allocation0], 16
    %58 = vst.msk [vmem:[%s57] sm:$0x1] %vm56, %v55
    %s59 = scalar_lea.vmem %s0, 3
    %v60 = vld [vmem:[%s59] sm:$0x1]
    %61 = vrot.lane.b32.xlu0 %v60, 72
    %v62 = vpop.permute.xlu0 %61
    %vm63 = vcmask 785984
    %64 = vst.msk [vmem:[#allocation0] sm:$0x1] %vm63, %v62
    %s65 = scalar_lea.vmem %s0, 8
    %v66 = vld [vmem:[%s65] sm:$0x1]
    %67 = vrot.lane.b32.xlu0 %v66, 64
    %v68 = vpop.permute.xlu0 %67
    %vm69 = vcmask 720384
    %s70 = scalar_lea.vmem [#allocation0], 8
    %71 = vst.msk [vmem:[%s70] sm:$0x1] %vm69, %v68
    %s72 = scalar_lea.vmem %s0, 13
    %v73 = vld [vmem:[%s72] sm:$0x1]
    %74 = vrot.lane.b32.xlu0 %v73, 56
    %v75 = vpop.permute.xlu0 %74
    %vm76 = vcmask 654784
    %s77 = scalar_lea.vmem [#allocation0], 16
    %78 = vst.msk [vmem:[%s77] sm:$0x1] %vm76, %v75
    %s79 = scalar_lea.vmem %s0, 2
    %v80 = vld [vmem:[%s79] sm:$0x1]
    %81 = vrot.lane.b32.xlu0 %v80, 48
    %v82 = vpop.permute.xlu0 %81
    %vm83 = vcmask 589184
    %84 = vst.msk [vmem:[#allocation0] sm:$0x1] %vm83, %v82
    %s85 = scalar_lea.vmem %s0, 7
    %v86 = vld [vmem:[%s85] sm:$0x1]
    %87 = vrot.lane.b32.xlu0 %v86, 40
    %v88 = vpop.permute.xlu0 %87
    %vm89 = vcmask 523584
    %s90 = scalar_lea.vmem [#allocation0], 8
    %91 = vst.msk [vmem:[%s90] sm:$0x1] %vm89, %v88
    %s92 = scalar_lea.vmem %s0, 12
    %v93 = vld [vmem:[%s92] sm:$0x1]
    %94 = vrot.lane.b32.xlu0 %v93, 32
    %v95 = vpop.permute.xlu0 %94
    %vm96 = vcmask 457984
    %s97 = scalar_lea.vmem [#allocation0], 16
    %98 = vst.msk [vmem:[%s97] sm:$0x1] %vm96, %v95
    %s99 = scalar_lea.vmem %s0, 1
    %v100 = vld [vmem:[%s99] sm:$0x1]
    %101 = vrot.lane.b32.xlu0 %v100, 24
    %v102 = vpop.permute.xlu0 %101
    %vm103 = vcmask 392384
    %104 = vst.msk [vmem:[#allocation0] sm:$0x1] %vm103, %v102
    %s105 = scalar_lea.vmem %s0, 6
    %v106 = vld [vmem:[%s105] sm:$0x1]
    %107 = vrot.lane.b32.xlu0 %v106, 16
    %v108 = vpop.permute.xlu0 %107
    %vm109 = vcmask 326784
    %s110 = scalar_lea.vmem [#allocation0], 8
    %111 = vst.msk [vmem:[%s110] sm:$0x1] %vm109, %v108
    %s112 = scalar_lea.vmem %s0, 11
    %v113 = vld [vmem:[%s112] sm:$0x1]
    %114 = vrot.lane.b32.xlu0 %v113, 8
    %v115 = vpop.permute.xlu0 %114
    %vm116 = vcmask 261184
    %s117 = scalar_lea.vmem [#allocation0], 16
    %118 = vst.msk [vmem:[%s117] sm:$0x1] %vm116, %v115
    %s120 = sshllo.u32 0, 1
    %v122 = vld [vmem:[#allocation0] sm:%s120]
    %s123 = sshllo.u32 0, 1
    %124 = vst [vmem:[%s1] sm:%s123] %v122
    %s125 = scalar_lea.vmem [#allocation0], 8
    %v126 = vld [vmem:[%s125] sm:%s120]
    %s127 = sshllo.u32 0, 1
    %s128 = scalar_lea.vmem %s1, 1
    %129 = vst [vmem:[%s128] sm:%s127] %v126
    %s130 = scalar_lea.vmem [#allocation0], 16
    %v131 = vld [vmem:[%s130] sm:%s120]
    %s132 = sshllo.u32 0, 1
    %s133 = smul.addr 1, 2
    %s134 = scalar_lea.vmem %s1, %s133
    %135 = vst [vmem:[%s134] sm:%s132] %v131

// kernel: debug_model_forward.1
$region0: #{debug_model_forward.1}
  #allocation0 [shape = 'u32[]', space=smem, size = 0x4, offset = 0x4, fixed_abs, tag = 'smem constant byte address 0x4 - core index']
  #allocation1 [shape = 'u32[144,128]{1,0:T(1,128)}', space=vmem, size = 0x12000, scoped, tag = 'internal scratch']
  %s0 = inlined_call_operand.vmem [shape: f32[16,512], index: 0, kind: input, shape index: {}]
  %s1 = inlined_call_operand.vmem [shape: f32[512,384], index: 1, kind: input, shape index: {}]
  %s2 = inlined_call_operand.vmem [shape: f32[1,384], index: 2, kind: input, shape index: {}]
  %s3 = inlined_call_operand.vmem [shape: f32[16,384], index: 3, kind: output, shape index: {}]
  %s4 = sld [smem:[#allocation0]]
  $region22: #{debug_model_forward.1} parent=0
    _
  %s6 = ssub.s32 1, %s4
  %s7 = scalar_select 0, %s6, %s4
  // Predicated region
  $region2: #{debug_model_forward.1} parent=0 // pred_check
    _
  $region3: #{debug_model_forward.1} parent=0 // pred_check_branch
    %9 = sbr.rel (0) target = $region5
  $region4: #{debug_model_forward.1} parent=0 // pred_region
    _
  $region5: #{debug_model_forward.1} parent=0 // pred_fallthru
    _
  // Predicated region
  $region6: #{debug_model_forward.1} parent=0 // pred_check
    _
  $region7: #{debug_model_forward.1} parent=0 // pred_check_branch
    %11 = sbr.rel (0) target = $region9
  $region8: #{debug_model_forward.1} parent=0 // pred_region
    _
  $region9: #{debug_model_forward.1} parent=0 // pred_fallthru
    _
  // Predicated region
  $region10: #{debug_model_forward.1} parent=0 // pred_check
    _
  $region11: #{debug_model_forward.1} parent=0 // pred_check_branch
    %13 = sbr.rel (0) target = $region13
  $region12: #{debug_model_forward.1} parent=0 // pred_region
    _
  $region13: #{debug_model_forward.1} parent=0 // pred_fallthru
    _
  %v14 = vld [vmem:[%s0] sm:$0xff]
  %v15 = vld [vmem:[%s0 + $0x8] sm:$0xff]
  %v16 = vld [vmem:[%s0 + $0x10] sm:$0xff]
  %v17 = vld [vmem:[%s0 + $0x18] sm:$0xff]
  %v18 = vld [vmem:[%s0 + $0x20] sm:$0xff]
  %v19 = vld [vmem:[%s0 + $0x28] sm:$0xff]
  %v20 = vld [vmem:[%s0 + $0x30] sm:$0xff]
  %v21 = vld [vmem:[%s0 + $0x38] sm:$0xff]
  %v22 = vld [vmem:[%s1] sm:$0xff]
  %v23 = vld [vmem:[%s1 + $0x8] sm:$0xff]
  %v24 = vld [vmem:[%s1 + $0x10] sm:$0xff]
  %v25 = vld [vmem:[%s1 + $0x18] sm:$0xff]
  %v26 = vld [vmem:[%s1 + $0x20] sm:$0xff]
  %v27 = vld [vmem:[%s1 + $0x28] sm:$0xff]
  %v28 = vld [vmem:[%s1 + $0x30] sm:$0xff]
  %v29 = vld [vmem:[%s1 + $0x38] sm:$0xff]
  %v30 = vld [vmem:[%s1 + $0x40] sm:$0xff]
  %v31 = vld [vmem:[%s1 + $0x48] sm:$0xff]
  %v32 = vld [vmem:[%s1 + $0x50] sm:$0xff]
  %v33 = vld [vmem:[%s1 + $0x58] sm:$0xff]
  %v34 = vld [vmem:[%s1 + $0x60] sm:$0xff]
  %v35 = vld [vmem:[%s1 + $0x68] sm:$0xff]
  %v36 = vld [vmem:[%s1 + $0x70] sm:$0xff]
  %v37 = vld [vmem:[%s1 + $0x78] sm:$0xff]
  %v38 = vld [vmem:[%s1 + $0x80] sm:$0xff]
  %v39 = vld [vmem:[%s1 + $0x88] sm:$0xff]
  %v40 = vld [vmem:[%s1 + $0x90] sm:$0xff]
  %v41 = vld [vmem:[%s1 + $0x98] sm:$0xff]
  %v42 = vld [vmem:[%s1 + $0xa0] sm:$0xff]
  %v43 = vld [vmem:[%s1 + $0xa8] sm:$0xff]
  %v44 = vld [vmem:[%s1 + $0xb0] sm:$0xff]
  %v45 = vld [vmem:[%s1 + $0xb8] sm:$0xff]
  %v46 = vld [vmem:[%s1 + $0xc0] sm:$0xff]
  %v47 = vld [vmem:[%s1 + $0xc8] sm:$0xff]
  %v48 = vld [vmem:[%s1 + $0xd0] sm:$0xff]
  %v49 = vld [vmem:[%s1 + $0xd8] sm:$0xff]
  %v50 = vld [vmem:[%s1 + $0xe0] sm:$0xff]
  %v51 = vld [vmem:[%s1 + $0xe8] sm:$0xff]
  %v52 = vld [vmem:[%s1 + $0xf0] sm:$0xff]
  %v53 = vld [vmem:[%s1 + $0xf8] sm:$0xff]
  %v54 = vld [vmem:[%s1 + $0x100] sm:$0xff]
  %v55 = vld [vmem:[%s1 + $0x108] sm:$0xff]
  %v56 = vld [vmem:[%s1 + $0x110] sm:$0xff]
  %v57 = vld [vmem:[%s1 + $0x118] sm:$0xff]
  %v58 = vld [vmem:[%s1 + $0x120] sm:$0xff]
  %v59 = vld [vmem:[%s1 + $0x128] sm:$0xff]
  %v60 = vld [vmem:[%s1 + $0x130] sm:$0xff]
  %v61 = vld [vmem:[%s1 + $0x138] sm:$0xff]
  %v62 = vld [vmem:[%s1 + $0x140] sm:$0xff]
  %v63 = vld [vmem:[%s1 + $0x148] sm:$0xff]
  %v64 = vld [vmem:[%s1 + $0x150] sm:$0xff]
  %v65 = vld [vmem:[%s1 + $0x158] sm:$0xff]
  %v66 = vld [vmem:[%s1 + $0x160] sm:$0xff]
  %v67 = vld [vmem:[%s1 + $0x168] sm:$0xff]
  %v68 = vld [vmem:[%s1 + $0x170] sm:$0xff]
  %v69 = vld [vmem:[%s1 + $0x178] sm:$0xff]
  %v70 = vld [vmem:[%s1 + $0x180] sm:$0xff]
  %v71 = vld [vmem:[%s1 + $0x188] sm:$0xff]
  %v72 = vld [vmem:[%s1 + $0x190] sm:$0xff]
  %v73 = vld [vmem:[%s1 + $0x198] sm:$0xff]
  %v74 = vld [vmem:[%s1 + $0x1a0] sm:$0xff]
  %v75 = vld [vmem:[%s1 + $0x1a8] sm:$0xff]
  %v76 = vld [vmem:[%s1 + $0x1b0] sm:$0xff]
  %v77 = vld [vmem:[%s1 + $0x1b8] sm:$0xff]
  %v78 = vld [vmem:[%s1 + $0x1c0] sm:$0xff]
  %v79 = vld [vmem:[%s1 + $0x1c8] sm:$0xff]
  %v80 = vld [vmem:[%s1 + $0x1d0] sm:$0xff]
  %v81 = vld [vmem:[%s1 + $0x1d8] sm:$0xff]
  %v82 = vld [vmem:[%s1 + $0x1e0] sm:$0xff]
  %v83 = vld [vmem:[%s1 + $0x1e8] sm:$0xff]
  %v84 = vld [vmem:[%s1 + $0x1f0] sm:$0xff]
  %v85 = vld [vmem:[%s1 + $0x1f8] sm:$0xff]
  %v86 = vld [vmem:[%s1 + $0x200] sm:$0xff]
  %v87 = vld [vmem:[%s1 + $0x208] sm:$0xff]
  %v88 = vld [vmem:[%s1 + $0x210] sm:$0xff]
  %v89 = vld [vmem:[%s1 + $0x218] sm:$0xff]
  %v90 = vld [vmem:[%s1 + $0x220] sm:$0xff]
  %v91 = vld [vmem:[%s1 + $0x228] sm:$0xff]
  %v92 = vld [vmem:[%s1 + $0x230] sm:$0xff]
  %v93 = vld [vmem:[%s1 + $0x238] sm:$0xff]
  %v94 = vld [vmem:[%s1 + $0x240] sm:$0xff]
  %v95 = vld [vmem:[%s1 + $0x248] sm:$0xff]
  %v96 = vld [vmem:[%s1 + $0x250] sm:$0xff]
  %v97 = vld [vmem:[%s1 + $0x258] sm:$0xff]
  %v98 = vld [vmem:[%s1 + $0x260] sm:$0xff]
  %v99 = vld [vmem:[%s1 + $0x268] sm:$0xff]
  %v100 = vld [vmem:[%s1 + $0x270] sm:$0xff]
  %v101 = vld [vmem:[%s1 + $0x278] sm:$0xff]
  %v102 = vld [vmem:[%s1 + $0x280] sm:$0xff]
  %v103 = vld [vmem:[%s1 + $0x288] sm:$0xff]
  %v104 = vld [vmem:[%s1 + $0x290] sm:$0xff]
  %v105 = vld [vmem:[%s1 + $0x298] sm:$0xff]
  %v106 = vld [vmem:[%s1 + $0x2a0] sm:$0xff]
  %v107 = vld [vmem:[%s1 + $0x2a8] sm:$0xff]
  %v108 = vld [vmem:[%s1 + $0x2b0] sm:$0xff]
  %v109 = vld [vmem:[%s1 + $0x2b8] sm:$0xff]
  %v110 = vld [vmem:[%s1 + $0x2c0] sm:$0xff]
  %v111 = vld [vmem:[%s1 + $0x2c8] sm:$0xff]
  %v112 = vld [vmem:[%s1 + $0x2d0] sm:$0xff]
  %v113 = vld [vmem:[%s1 + $0x2d8] sm:$0xff]
  %v114 = vld [vmem:[%s1 + $0x2e0] sm:$0xff]
  %v115 = vld [vmem:[%s1 + $0x2e8] sm:$0xff]
  %v116 = vld [vmem:[%s1 + $0x2f0] sm:$0xff]
  %v117 = vld [vmem:[%s1 + $0x2f8] sm:$0xff]
  %v118 = vld [vmem:[%s1 + $0x300] sm:$0xff]
  %v119 = vld [vmem:[%s1 + $0x308] sm:$0xff]
  %v120 = vld [vmem:[%s1 + $0x310] sm:$0xff]
  %v121 = vld [vmem:[%s1 + $0x318] sm:$0xff]
  %v122 = vld [vmem:[%s1 + $0x320] sm:$0xff]
  %v123 = vld [vmem:[%s1 + $0x328] sm:$0xff]
  %v124 = vld [vmem:[%s1 + $0x330] sm:$0xff]
  %v125 = vld [vmem:[%s1 + $0x338] sm:$0xff]
  %v126 = vld [vmem:[%s1 + $0x340] sm:$0xff]
  %v127 = vld [vmem:[%s1 + $0x348] sm:$0xff]
  %v128 = vld [vmem:[%s1 + $0x350] sm:$0xff]
  %v129 = vld [vmem:[%s1 + $0x358] sm:$0xff]
  %v130 = vld [vmem:[%s1 + $0x360] sm:$0xff]
  %v131 = vld [vmem:[%s1 + $0x368] sm:$0xff]
  %v132 = vld [vmem:[%s1 + $0x370] sm:$0xff]
  %v133 = vld [vmem:[%s1 + $0x378] sm:$0xff]
  %v134 = vld [vmem:[%s1 + $0x380] sm:$0xff]
  %v135 = vld [vmem:[%s1 + $0x388] sm:$0xff]
  %v136 = vld [vmem:[%s1 + $0x390] sm:$0xff]
  %v137 = vld [vmem:[%s1 + $0x398] sm:$0xff]
  %v138 = vld [vmem:[%s1 + $0x3a0] sm:$0xff]
  %v139 = vld [vmem:[%s1 + $0x3a8] sm:$0xff]
  %v140 = vld [vmem:[%s1 + $0x3b0] sm:$0xff]
  %v141 = vld [vmem:[%s1 + $0x3b8] sm:$0xff]
  %v142 = vld [vmem:[%s1 + $0x3c0] sm:$0xff]
  %v143 = vld [vmem:[%s1 + $0x3c8] sm:$0xff]
  %v144 = vld [vmem:[%s1 + $0x3d0] sm:$0xff]
  %v145 = vld [vmem:[%s1 + $0x3d8] sm:$0xff]
  %v146 = vld [vmem:[%s1 + $0x3e0] sm:$0xff]
  %v147 = vld [vmem:[%s1 + $0x3e8] sm:$0xff]
  %v148 = vld [vmem:[%s1 + $0x3f0] sm:$0xff]
  %v149 = vld [vmem:[%s1 + $0x3f8] sm:$0xff]
  %v150 = vld [vmem:[%s1 + $0x400] sm:$0xff]
  %v151 = vld [vmem:[%s1 + $0x408] sm:$0xff]
  %v152 = vld [vmem:[%s1 + $0x410] sm:$0xff]
  %v153 = vld [vmem:[%s1 + $0x418] sm:$0xff]
  %v154 = vld [vmem:[%s1 + $0x420] sm:$0xff]
  %v155 = vld [vmem:[%s1 + $0x428] sm:$0xff]
  %v156 = vld [vmem:[%s1 + $0x430] sm:$0xff]
  %v157 = vld [vmem:[%s1 + $0x438] sm:$0xff]
  %v158 = vld [vmem:[%s1 + $0x440] sm:$0xff]
  %v159 = vld [vmem:[%s1 + $0x448] sm:$0xff]
  %v160 = vld [vmem:[%s1 + $0x450] sm:$0xff]
  %v161 = vld [vmem:[%s1 + $0x458] sm:$0xff]
  %v162 = vld [vmem:[%s1 + $0x460] sm:$0xff]
  %v163 = vld [vmem:[%s1 + $0x468] sm:$0xff]
  %v164 = vld [vmem:[%s1 + $0x470] sm:$0xff]
  %v165 = vld [vmem:[%s1 + $0x478] sm:$0xff]
  %v166 = vld [vmem:[%s1 + $0x480] sm:$0xff]
  %v167 = vld [vmem:[%s1 + $0x488] sm:$0xff]
  %v168 = vld [vmem:[%s1 + $0x490] sm:$0xff]
  %v169 = vld [vmem:[%s1 + $0x498] sm:$0xff]
  %v170 = vld [vmem:[%s1 + $0x4a0] sm:$0xff]
  %v171 = vld [vmem:[%s1 + $0x4a8] sm:$0xff]
  %v172 = vld [vmem:[%s1 + $0x4b0] sm:$0xff]
  %v173 = vld [vmem:[%s1 + $0x4b8] sm:$0xff]
  %v174 = vld [vmem:[%s1 + $0x4c0] sm:$0xff]
  %v175 = vld [vmem:[%s1 + $0x4c8] sm:$0xff]
  %v176 = vld [vmem:[%s1 + $0x4d0] sm:$0xff]
  %v177 = vld [vmem:[%s1 + $0x4d8] sm:$0xff]
  %v178 = vld [vmem:[%s1 + $0x4e0] sm:$0xff]
  %v179 = vld [vmem:[%s1 + $0x4e8] sm:$0xff]
  %v180 = vld [vmem:[%s1 + $0x4f0] sm:$0xff]
  %v181 = vld [vmem:[%s1 + $0x4f8] sm:$0xff]
  %v182 = vld [vmem:[%s1 + $0x500] sm:$0xff]
  %v183 = vld [vmem:[%s1 + $0x508] sm:$0xff]
  %v184 = vld [vmem:[%s1 + $0x510] sm:$0xff]
  %v185 = vld [vmem:[%s1 + $0x518] sm:$0xff]
  %v186 = vld [vmem:[%s1 + $0x520] sm:$0xff]
  %v187 = vld [vmem:[%s1 + $0x528] sm:$0xff]
  %v188 = vld [vmem:[%s1 + $0x530] sm:$0xff]
  %v189 = vld [vmem:[%s1 + $0x538] sm:$0xff]
  %v190 = vld [vmem:[%s1 + $0x540] sm:$0xff]
  %v191 = vld [vmem:[%s1 + $0x548] sm:$0xff]
  %v192 = vld [vmem:[%s1 + $0x550] sm:$0xff]
  %v193 = vld [vmem:[%s1 + $0x558] sm:$0xff]
  %v194 = vld [vmem:[%s1 + $0x560] sm:$0xff]
  %v195 = vld [vmem:[%s1 + $0x568] sm:$0xff]
  %v196 = vld [vmem:[%s1 + $0x570] sm:$0xff]
  %v197 = vld [vmem:[%s1 + $0x578] sm:$0xff]
  %v198 = vld [vmem:[%s1 + $0x580] sm:$0xff]
  %v199 = vld [vmem:[%s1 + $0x588] sm:$0xff]
  %v200 = vld [vmem:[%s1 + $0x590] sm:$0xff]
  %v201 = vld [vmem:[%s1 + $0x598] sm:$0xff]
  %v202 = vld [vmem:[%s1 + $0x5a0] sm:$0xff]
  %v203 = vld [vmem:[%s1 + $0x5a8] sm:$0xff]
  %v204 = vld [vmem:[%s1 + $0x5b0] sm:$0xff]
  %v205 = vld [vmem:[%s1 + $0x5b8] sm:$0xff]
  %v206 = vld [vmem:[%s1 + $0x5c0] sm:$0xff]
  %v207 = vld [vmem:[%s1 + $0x5c8] sm:$0xff]
  %v208 = vld [vmem:[%s1 + $0x5d0] sm:$0xff]
  %v209 = vld [vmem:[%s1 + $0x5d8] sm:$0xff]
  %v210 = vld [vmem:[%s1 + $0x5e0] sm:$0xff]
  %v211 = vld [vmem:[%s1 + $0x5e8] sm:$0xff]
  %v212 = vld [vmem:[%s1 + $0x5f0] sm:$0xff]
  %v213 = vld [vmem:[%s1 + $0x5f8] sm:$0xff]
  %v214 = vld [vmem:[%s2] sm:$0x7]
  %v216 = vlaneseq
  %v217 = vshrl.u32 %v216, 7
  %v218 = vsub.s32 0, %v217
  %v219 = vrot.slane %v214, %v218
  %v220 = vlaneseq
  %v221 = vshrl.u32 %v220, 7
  %v222 = vsub.s32 1, %v221
  %v223 = vrot.slane %v214, %v222
  %v224 = vlaneseq
  %v225 = vshrl.u32 %v224, 7
  %v226 = vsub.s32 2, %v225
  %v227 = vrot.slane %v214, %v226
  %231 = vmatprep.subr.mxu0 %v23
  %232 = vmatpush1.msra.mxu0 %v22
  %233 = vmatprep.subr.mxu0 %v26
  %234 = vmatpush1.msra.mxu0 %v25
  %235 = vmatprep.subr.mxu0 %v29
  %236 = vmatpush1.msra.mxu0 %v28
  %237 = vmatprep.subr.mxu0 %v32
  %238 = vmatpush1.msra.mxu0 %v31
  %239 = vmatprep.subr.mxu0 %v35
  %240 = vmatpush1.msra.mxu0 %v34
  %241 = vmatprep.subr.mxu0 %v38
  %242 = vmatpush1.msra.mxu0 %v37
  %243 = vmatprep.subr.mxu0 %v41
  %244 = vmatpush1.msra.mxu0 %v40
  %245 = vmatprep.subr.mxu0 %v44
  %246 = vmatpush1.msra.mxu0 %v43
  %247 = vmatprep.subr.mxu0 %v47
  %248 = vmatpush1.msra.mxu0 %v46
  %249 = vmatprep.subr.mxu0 %v50
  %250 = vmatpush1.msra.mxu0 %v49
  %251 = vmatprep.subr.mxu0 %v53
  %252 = vmatpush1.msra.mxu0 %v52
  %253 = vmatprep.subr.mxu0 %v56
  %254 = vmatpush1.msra.mxu0 %v55
  %255 = vmatprep.subr.mxu0 %v59
  %256 = vmatpush1.msra.mxu0 %v58
  %257 = vmatprep.subr.mxu0 %v62
  %258 = vmatpush1.msra.mxu0 %v61
  %259 = vmatprep.subr.mxu0 %v65
  %260 = vmatpush1.msra.mxu0 %v64
  %261 = vmatprep.subr.mxu0 %v68
  %262 = vmatpush1.msra.mxu0 %v67
  %263 = vmatprep.subr.mxu0 %v71
  %264 = vmatpush1.msra.mxu0 %v70
  %265 = vmatprep.subr.mxu0 %v74
  %266 = vmatpush1.msra.mxu0 %v73
  %267 = vmatprep.subr.mxu0 %v77
  %268 = vmatpush1.msra.mxu0 %v76
  %269 = vmatprep.subr.mxu0 %v80
  %270 = vmatpush1.msra.mxu0 %v79
  %271 = vmatprep.subr.mxu0 %v83
  %272 = vmatpush1.msra.mxu0 %v82
  %273 = vmatprep.subr.mxu0 %v86
  %274 = vmatpush1.msra.mxu0 %v85
  %275 = vmatprep.subr.mxu0 %v89
  %276 = vmatpush1.msra.mxu0 %v88
  %277 = vmatprep.subr.mxu0 %v92
  %278 = vmatpush1.msra.mxu0 %v91
  %279 = vmatprep.subr.mxu0 %v95
  %280 = vmatpush1.msra.mxu0 %v94
  %281 = vmatprep.subr.mxu0 %v98
  %282 = vmatpush1.msra.mxu0 %v97
  %283 = vmatprep.subr.mxu0 %v101
  %284 = vmatpush1.msra.mxu0 %v100
  %285 = vmatprep.subr.mxu0 %v104
  %286 = vmatpush1.msra.mxu0 %v103
  %287 = vmatprep.subr.mxu0 %v107
  %288 = vmatpush1.msra.mxu0 %v106
  %289 = vmatprep.subr.mxu0 %v110
  %290 = vmatpush1.msra.mxu0 %v109
  %291 = vmatprep.subr.mxu0 %v113
  %292 = vmatpush1.msra.mxu0 %v112
  %293 = vmatprep.subr.mxu0 %v116
  %294 = vmatpush1.msra.mxu0 %v115
  %295 = vmatprep.mubr.f32.mxu0 %v15
  %296 = vmatmul.mubr.f32.gmra.mrb[0].mxu0 %v14
  %v297 = vpop.f32.mrb[0].mxu0
  %v298 = vadd.f32 %v219, %v297
  %v299 = vpop.f32.mrb[0].mxu0
  %v300 = vadd.f32 %v223, %v299
  %301 = vmatprep.mubr.f32.mxu0 %v19
  %302 = vmatmul.mubr.f32.gmra.mrb[0].mxu0 %v18
  %v303 = vpop.f32.mrb[0].mxu0
  %v304 = vadd.f32 %v219, %v303
  %v305 = vpop.f32.mrb[0].mxu0
  %v306 = vadd.f32 %v223, %v305
  %307 = vdwg.mxu0
  %308 = vmatprep.subr.mxu0 %v119
  %309 = vmatpush1.msra.mxu0 %v118
  %310 = vmatprep.subr.mxu0 %v122
  %311 = vmatpush1.msra.mxu0 %v121
  %312 = vmatprep.subr.mxu0 %v125
  %313 = vmatpush1.msra.mxu0 %v124
  %314 = vmatprep.subr.mxu0 %v128
  %315 = vmatpush1.msra.mxu0 %v127
  %316 = vmatprep.subr.mxu0 %v131
  %317 = vmatpush1.msra.mxu0 %v130
  %318 = vmatprep.subr.mxu0 %v134
  %319 = vmatpush1.msra.mxu0 %v133
  %320 = vmatprep.subr.mxu0 %v137
  %321 = vmatpush1.msra.mxu0 %v136
  %322 = vmatprep.subr.mxu0 %v140
  %323 = vmatpush1.msra.mxu0 %v139
  %324 = vmatprep.subr.mxu0 %v143
  %325 = vmatpush1.msra.mxu0 %v142
  %326 = vmatprep.subr.mxu0 %v146
  %327 = vmatpush1.msra.mxu0 %v145
  %328 = vmatprep.subr.mxu0 %v149
  %329 = vmatpush1.msra.mxu0 %v148
  %330 = vmatprep.subr.mxu0 %v152
  %331 = vmatpush1.msra.mxu0 %v151
  %332 = vmatprep.subr.mxu0 %v155
  %333 = vmatpush1.msra.mxu0 %v154
  %334 = vmatprep.subr.mxu0 %v158
  %335 = vmatpush1.msra.mxu0 %v157
  %336 = vmatprep.subr.mxu0 %v161
  %337 = vmatpush1.msra.mxu0 %v160
  %338 = vmatprep.subr.mxu0 %v164
  %339 = vmatpush1.msra.mxu0 %v163
  %340 = vmatprep.subr.mxu0 %v167
  %341 = vmatpush1.msra.mxu0 %v166
  %342 = vmatprep.subr.mxu0 %v170
  %343 = vmatpush1.msra.mxu0 %v169
  %344 = vmatprep.subr.mxu0 %v173
  %345 = vmatpush1.msra.mxu0 %v172
  %346 = vmatprep.subr.mxu0 %v176
  %347 = vmatpush1.msra.mxu0 %v175
  %348 = vmatprep.subr.mxu0 %v179
  %349 = vmatpush1.msra.mxu0 %v178
  %350 = vmatprep.subr.mxu0 %v182
  %351 = vmatpush1.msra.mxu0 %v181
  %352 = vmatprep.subr.mxu0 %v185
  %353 = vmatpush1.msra.mxu0 %v184
  %354 = vmatprep.subr.mxu0 %v188
  %355 = vmatpush1.msra.mxu0 %v187
  %356 = vmatprep.subr.mxu0 %v191
  %357 = vmatpush1.msra.mxu0 %v190
  %358 = vmatprep.subr.mxu0 %v194
  %359 = vmatpush1.msra.mxu0 %v193
  %360 = vmatprep.subr.mxu0 %v197
  %361 = vmatpush1.msra.mxu0 %v196
  %362 = vmatprep.subr.mxu0 %v200
  %363 = vmatpush1.msra.mxu0 %v199
  %364 = vmatprep.subr.mxu0 %v203
  %365 = vmatpush1.msra.mxu0 %v202
  %366 = vmatprep.subr.mxu0 %v206
  %367 = vmatpush1.msra.mxu0 %v205
  %368 = vmatprep.subr.mxu0 %v209
  %369 = vmatpush1.msra.mxu0 %v208
  %370 = vmatprep.subr.mxu0 %v212
  %371 = vmatpush1.msra.mxu0 %v211
  %372 = vmatprep.mubr.f32.mxu0 %v17
  %373 = vmatmul.mubr.f32.gmra.mrb[0].mxu0 %v16
  %v374 = vpop.f32.mrb[0].mxu0
  %v375 = vadd.f32 %v298, %v374
  %v376 = vpop.f32.mrb[0].mxu0
  %v377 = vadd.f32 %v300, %v376
  %378 = vmatprep.mubr.f32.mxu0 %v21
  %379 = vmatmul.mubr.f32.gmra.mrb[0].mxu0 %v20
  %v380 = vpop.f32.mrb[0].mxu0
  %v381 = vadd.f32 %v304, %v380
  %v382 = vpop.f32.mrb[0].mxu0
  %v383 = vadd.f32 %v306, %v382
  %384 = vdwg.mxu0
  %385 = vmatprep.subr.mxu0 0.0
  %386 = vmatpush1.msra.mxu0 %v24
  %387 = vmatprep.subr.mxu0 0.0
  %388 = vmatpush1.msra.mxu0 %v27
  %389 = vmatprep.subr.mxu0 0.0
  %390 = vmatpush1.msra.mxu0 %v30
  %391 = vmatprep.subr.mxu0 0.0
  %392 = vmatpush1.msra.mxu0 %v33
  %393 = vmatprep.subr.mxu0 0.0
  %394 = vmatpush1.msra.mxu0 %v36
  %395 = vmatprep.subr.mxu0 0.0
  %396 = vmatpush1.msra.mxu0 %v39
  %397 = vmatprep.subr.mxu0 0.0
  %398 = vmatpush1.msra.mxu0 %v42
  %399 = vmatprep.subr.mxu0 0.0
  %400 = vmatpush1.msra.mxu0 %v45
  %401 = vmatprep.subr.mxu0 0.0
  %402 = vmatpush1.msra.mxu0 %v48
  %403 = vmatprep.subr.mxu0 0.0
  %404 = vmatpush1.msra.mxu0 %v51
  %405 = vmatprep.subr.mxu0 0.0
  %406 = vmatpush1.msra.mxu0 %v54
  %407 = vmatprep.subr.mxu0 0.0
  %408 = vmatpush1.msra.mxu0 %v57
  %409 = vmatprep.subr.mxu0 0.0
  %410 = vmatpush1.msra.mxu0 %v60
  %411 = vmatprep.subr.mxu0 0.0
  %412 = vmatpush1.msra.mxu0 %v63
  %413 = vmatprep.subr.mxu0 0.0
  %414 = vmatpush1.msra.mxu0 %v66
  %415 = vmatprep.subr.mxu0 0.0
  %416 = vmatpush1.msra.mxu0 %v69
  %417 = vmatprep.subr.mxu0 0.0
  %418 = vmatpush1.msra.mxu0 %v72
  %419 = vmatprep.subr.mxu0 0.0
  %420 = vmatpush1.msra.mxu0 %v75
  %421 = vmatprep.subr.mxu0 0.0
  %422 = vmatpush1.msra.mxu0 %v78
  %423 = vmatprep.subr.mxu0 0.0
  %424 = vmatpush1.msra.mxu0 %v81
  %425 = vmatprep.subr.mxu0 0.0
  %426 = vmatpush1.msra.mxu0 %v84
  %427 = vmatprep.subr.mxu0 0.0
  %428 = vmatpush1.msra.mxu0 %v87
  %429 = vmatprep.subr.mxu0 0.0
  %430 = vmatpush1.msra.mxu0 %v90
  %431 = vmatprep.subr.mxu0 0.0
  %432 = vmatpush1.msra.mxu0 %v93
  %433 = vmatprep.subr.mxu0 0.0
  %434 = vmatpush1.msra.mxu0 %v96
  %435 = vmatprep.subr.mxu0 0.0
  %436 = vmatpush1.msra.mxu0 %v99
  %437 = vmatprep.subr.mxu0 0.0
  %438 = vmatpush1.msra.mxu0 %v102
  %439 = vmatprep.subr.mxu0 0.0
  %440 = vmatpush1.msra.mxu0 %v105
  %441 = vmatprep.subr.mxu0 0.0
  %442 = vmatpush1.msra.mxu0 %v108
  %443 = vmatprep.subr.mxu0 0.0
  %444 = vmatpush1.msra.mxu0 %v111
  %445 = vmatprep.subr.mxu0 0.0
  %446 = vmatpush1.msra.mxu0 %v114
  %447 = vmatprep.subr.mxu0 0.0
  %448 = vmatpush1.msra.mxu0 %v117
  %449 = vmatprep.mubr.f32.mxu0 %v15
  %450 = vmatmul.mubr.f32.gmra.mrb[0].mxu0 %v14
  %v451 = vpop.f32.mrb[0].mxu0
  %v452 = vadd.f32 %v227, %v451
  %v453 = vpop.f32.mrb[0].mxu0
  %454 = vmatprep.mubr.f32.mxu0 %v19
  %455 = vmatmul.mubr.f32.gmra.mrb[0].mxu0 %v18
  %v456 = vpop.f32.mrb[0].mxu0
  %v457 = vadd.f32 %v227, %v456
  %v458 = vpop.f32.mrb[0].mxu0
  %459 = vdwg.mxu0
  %460 = vmatprep.subr.mxu0 0.0
  %461 = vmatpush1.msra.mxu0 %v120
  %462 = vmatprep.subr.mxu0 0.0
  %463 = vmatpush1.msra.mxu0 %v123
  %464 = vmatprep.subr.mxu0 0.0
  %465 = vmatpush1.msra.mxu0 %v126
  %466 = vmatprep.subr.mxu0 0.0
  %467 = vmatpush1.msra.mxu0 %v129
  %468 = vmatprep.subr.mxu0 0.0
  %469 = vmatpush1.msra.mxu0 %v132
  %470 = vmatprep.subr.mxu0 0.0
  %471 = vmatpush1.msra.mxu0 %v135
  %472 = vmatprep.subr.mxu0 0.0
  %473 = vmatpush1.msra.mxu0 %v138
  %474 = vmatprep.subr.mxu0 0.0
  %475 = vmatpush1.msra.mxu0 %v141
  %476 = vmatprep.subr.mxu0 0.0
  %477 = vmatpush1.msra.mxu0 %v144
  %478 = vmatprep.subr.mxu0 0.0
  %479 = vmatpush1.msra.mxu0 %v147
  %480 = vmatprep.subr.mxu0 0.0
  %481 = vmatpush1.msra.mxu0 %v150
  %482 = vmatprep.subr.mxu0 0.0
  %483 = vmatpush1.msra.mxu0 %v153
  %484 = vmatprep.subr.mxu0 0.0
  %485 = vmatpush1.msra.mxu0 %v156
  %486 = vmatprep.subr.mxu0 0.0
  %487 = vmatpush1.msra.mxu0 %v159
  %488 = vmatprep.subr.mxu0 0.0
  %489 = vmatpush1.msra.mxu0 %v162
  %490 = vmatprep.subr.mxu0 0.0
  %491 = vmatpush1.msra.mxu0 %v165
  %492 = vmatprep.subr.mxu0 0.0
  %493 = vmatpush1.msra.mxu0 %v168
  %494 = vmatprep.subr.mxu0 0.0
  %495 = vmatpush1.msra.mxu0 %v171
  %496 = vmatprep.subr.mxu0 0.0
  %497 = vmatpush1.msra.mxu0 %v174
  %498 = vmatprep.subr.mxu0 0.0
  %499 = vmatpush1.msra.mxu0 %v177
  %500 = vmatprep.subr.mxu0 0.0
  %501 = vmatpush1.msra.mxu0 %v180
  %502 = vmatprep.subr.mxu0 0.0
  %503 = vmatpush1.msra.mxu0 %v183
  %504 = vmatprep.subr.mxu0 0.0
  %505 = vmatpush1.msra.mxu0 %v186
  %506 = vmatprep.subr.mxu0 0.0
  %507 = vmatpush1.msra.mxu0 %v189
  %508 = vmatprep.subr.mxu0 0.0
  %509 = vmatpush1.msra.mxu0 %v192
  %510 = vmatprep.subr.mxu0 0.0
  %511 = vmatpush1.msra.mxu0 %v195
  %512 = vmatprep.subr.mxu0 0.0
  %513 = vmatpush1.msra.mxu0 %v198
  %514 = vmatprep.subr.mxu0 0.0
  %515 = vmatpush1.msra.mxu0 %v201
  %516 = vmatprep.subr.mxu0 0.0
  %517 = vmatpush1.msra.mxu0 %v204
  %518 = vmatprep.subr.mxu0 0.0
  %519 = vmatpush1.msra.mxu0 %v207
  %520 = vmatprep.subr.mxu0 0.0
  %521 = vmatpush1.msra.mxu0 %v210
  %522 = vmatprep.subr.mxu0 0.0
  %523 = vmatpush1.msra.mxu0 %v213
  %524 = vmatprep.mubr.f32.mxu0 %v17
  %525 = vmatmul.mubr.f32.gmra.mrb[0].mxu0 %v16
  %v526 = vpop.f32.mrb[0].mxu0
  %v527 = vadd.f32 %v452, %v526
  %v528 = vpop.f32.mrb[0].mxu0
  %529 = vmatprep.mubr.f32.mxu0 %v21
  %530 = vmatmul.mubr.f32.gmra.mrb[0].mxu0 %v20
  %v531 = vpop.f32.mrb[0].mxu0
  %v532 = vadd.f32 %v457, %v531
  %v533 = vpop.f32.mrb[0].mxu0
  %534 = vdwg.mxu0
  %535 = vst [vmem:[%s3] sm:$0xff] %v375
  %536 = vst [vmem:[%s3 + $0x8] sm:$0xff] %v377
  %537 = vst [vmem:[%s3 + $0x10] sm:$0xff] %v527
  %538 = vst [vmem:[%s3 + $0x18] sm:$0xff] %v381
  %539 = vst [vmem:[%s3 + $0x20] sm:$0xff] %v383
  %540 = vst [vmem:[%s3 + $0x28] sm:$0xff] %v532
  // Predicated region
  $region14: #{debug_model_forward.1} parent=0 // pred_check
    _
  $region15: #{debug_model_forward.1} parent=0 // pred_check_branch
    %542 = sbr.rel (0) target = $region17
  $region16: #{debug_model_forward.1} parent=0 // pred_region
    _
  $region17: #{debug_model_forward.1} parent=0 // pred_fallthru
    _
  // Predicated region
  $region18: #{debug_model_forward.1} parent=0 // pred_check
    _
  $region19: #{debug_model_forward.1} parent=0 // pred_check_branch
    %544 = sbr.rel (0) target = $region21
  $region20: #{debug_model_forward.1} parent=0 // pred_region
    _
  $region21: #{debug_model_forward.1} parent=0 // pred_fallthru
    _

</llo_original>
